<compile_context>
chip_gen: v7x
topology: tpu7x:2x2x1
jax: 0.10.0
libtpu: 0.0.40
codegen_flags: <defaults>
</compile_context>

<pallas_src>
import jax
import jax.numpy as jnp
from jax.experimental import pallas as pl
from jax.experimental.pallas import tpu as pltpu


def _llama3_hidden_dim(hidden_dim, multiple_of, ffn_hidden_dim=None,
                       ffn_dim_multiplier=None):
    """Replicates the hidden_dim arithmetic from LLAMA3FeedForward.__init__."""
    if ffn_hidden_dim is not None:
        return ffn_hidden_dim
    hidden_dim = int(2 * hidden_dim / 3)
    if ffn_dim_multiplier is not None:
        hidden_dim = int(ffn_dim_multiplier * hidden_dim)
    return multiple_of * ((hidden_dim + multiple_of - 1) // multiple_of)


def _round_up(x, m):
    return ((x + m - 1) // m) * m


def _pick_hidden_tile(hidden, th_max):
    """Largest divisor of `hidden` <= th_max, preferring 256-aligned (v6e/v7x
    MXU) then 128-aligned (v5e floor). Falls back to untiled hidden."""
    if hidden <= th_max:
        return hidden
    for step in (256, 128):
        start = th_max - th_max % step
        for cand in range(start, step - 1, -step):
            if hidden % cand == 0:
                return cand
    return hidden  # no clean divisor: keep hidden untiled (correct, VMEM-heavy)


def _vmem_capacity_bytes():
    try:
        return int(pltpu.get_tpu_info().vmem_capacity_bytes)
    except Exception:
        return 64 << 20  # conservative: v7x per-TC VMEM


def _ffn_kernel(x_ref, w13_ref, w2_ref, o_ref, acc_ref):
    # x_ref:   (tm, dim)       token tile
    # w13_ref: (dim, 2*th)     [w1 tile | w3 tile] for current hidden block
    # w2_ref:  (th, dim)       w2 tile for current hidden block
    # o_ref:   (tm, dim)       output tile (resident across hidden axis)
    # acc_ref: (tm, dim) f32   scratch accumulator
    h = pl.program_id(1)

    @pl.when(h == 0)
    def _():
        acc_ref[...] = jnp.zeros_like(acc_ref)

    # Native-dtype MXU operands, f32 accumulation.
    h13 = jnp.dot(x_ref[...], w13_ref[...],
                  preferred_element_type=jnp.float32)       # (tm, 2*th) f32
    th = h13.shape[1] // 2
    h1 = h13[:, :th]
    h3 = h13[:, th:]
    # SiLU and gating stay in f32 on the VPU (sigmoid goes to the EUP).
    g = (h1 * jax.nn.sigmoid(h1)) * h3                       # (tm, th) f32
    acc_ref[...] += jnp.dot(g.astype(w2_ref.dtype), w2_ref[...],
                            preferred_element_type=jnp.float32)

    @pl.when(h == pl.num_programs(1) - 1)
    def _():
        o_ref[...] = acc_ref[...].astype(o_ref.dtype)


def llama3_feedforward(x, w1, w3, w2, *, tm=256, th_max=None):
    """x: (..., dim); w1/w3: (dim, hidden); w2: (hidden, dim)."""
    dim = x.shape[-1]
    hidden = w1.shape[1]
    assert w3.shape == (dim, hidden) and w2.shape == (hidden, dim)

    lead = x.shape[:-1]
    x2d = x.reshape(-1, dim)
    M = x2d.shape[0]

    # Token tile: large enough to feed the MXU, but no larger than (padded) M.
    tm = min(tm, _round_up(max(M, 8), 8))
    Mp = _round_up(M, tm)
    if Mp != M:
        x2d = jnp.pad(x2d, ((0, Mp - M), (0, 0)))  # masked/padded final tile

    # Hidden tile: ~half the slab on small-VMEM chips (v7x: 64 MiB per TC).
    if th_max is None:
        th_max = 2048 if _vmem_capacity_bytes() > (64 << 20) else 1024
    th = _pick_hidden_tile(hidden, th_max)
    n_h = hidden // th

    # Fuse w1/w3 into one tile-interleaved weight: columns
    # [h*2*th : (h+1)*2*th] == [w1[:, h*th:(h+1)*th] | w3[:, h*th:(h+1)*th]].
    w13 = jnp.concatenate(
        [w1.reshape(dim, n_h, th), w3.reshape(dim, n_h, th)], axis=2
    ).reshape(dim, 2 * hidden)

    # VMEM budget: double-buffered x/out/w13/w2 tiles + f32 accumulator.
    e_x = jnp.dtype(x.dtype).itemsize
    e_w = jnp.dtype(w13.dtype).itemsize
    need = (2 * tm * dim * e_x            # x tiles (double-buffered)
            + 2 * tm * dim * e_x          # out tiles
            + 2 * dim * (2 * th) * e_w    # w13 tiles
            + 2 * th * dim * e_w          # w2 tiles
            + tm * dim * 4)               # accumulator
    vmem_limit = max(32 << 20, min(int(need * 1.25) + (16 << 20),
                                   _vmem_capacity_bytes()))

    cost = pl.CostEstimate(
        flops=6 * Mp * dim * hidden,           # gate+up (4*M*d*h) + down (2*M*h*d)
        transcendentals=Mp * hidden,           # sigmoid
        bytes_accessed=(x2d.size * e_x + w13.size * e_w
                        + w2.size * jnp.dtype(w2.dtype).itemsize
                        + Mp * dim * e_x),
    )

    out2d = pl.pallas_call(
        _ffn_kernel,
        out_shape=jax.ShapeDtypeStruct((Mp, dim), x.dtype),
        grid_spec=pltpu.PrefetchScalarGridSpec(
            num_scalar_prefetch=0,
            grid=(Mp // tm, n_h),
            in_specs=[
                pl.BlockSpec((tm, dim), lambda i, h: (i, 0)),       # x tile
                pl.BlockSpec((dim, 2 * th), lambda i, h: (0, h)),   # [w1|w3] slab
                pl.BlockSpec((th, dim), lambda i, h: (h, 0)),       # w2 slab
            ],
            out_specs=pl.BlockSpec((tm, dim), lambda i, h: (i, 0)),
            scratch_shapes=[pltpu.VMEM((tm, dim), jnp.float32)],
        ),
        compiler_params=pltpu.CompilerParams(
            dimension_semantics=("parallel", "arbitrary"),  # tokens shard across TCs
            vmem_limit_bytes=vmem_limit,
        ),
        cost_estimate=cost,
    )(x2d, w13, w2)

    if Mp != M:
        out2d = out2d[:M]
    return out2d.reshape(*lead, dim)


if __name__ == "__main__":
    # Small shapes consistent with the module:
    #   dim=128, hidden_dim arg = 4*dim = 512, multiple_of=128
    #   -> hidden = 128 * ceil(int(2*512/3) / 128) = 384
    dim = 128
    hidden = _llama3_hidden_dim(hidden_dim=4 * dim, multiple_of=128)
    batch, seq = 2, 8

    key = jax.random.PRNGKey(0)
    kx, k1, k2, k3 = jax.random.split(key, 4)
    x = jax.random.normal(kx, (batch, seq, dim), dtype=jnp.float32)
    # Deterministic "Linear" weights, stored as (in, out) == PyTorch W.T
    w1 = jax.random.normal(k1, (dim, hidden), dtype=jnp.float32) * 0.02
    w3 = jax.random.normal(k3, (dim, hidden), dtype=jnp.float32) * 0.02
    w2 = jax.random.normal(k2, (hidden, dim), dtype=jnp.float32) * 0.02

    # Pure-JAX reference
    h1 = x @ w1
    ref = ((h1 * jax.nn.sigmoid(h1)) * (x @ w3)) @ w2

    # f32 path
    out = jax.block_until_ready(llama3_feedforward(x, w1, w3, w2))
    assert out.shape == x.shape
    assert jnp.allclose(out, ref, atol=1e-4, rtol=1e-3), \
        float(jnp.max(jnp.abs(out - ref)))

    # bf16 path (native-dtype MXU operands with f32 accumulation)
    xb, w1b, w3b, w2b = (a.astype(jnp.bfloat16) for a in (x, w1, w3, w2))
    out_bf16 = jax.block_until_ready(llama3_feedforward(xb, w1b, w3b, w2b))
    assert out_bf16.shape == x.shape and out_bf16.dtype == jnp.bfloat16
    assert float(jnp.max(jnp.abs(out_bf16.astype(jnp.float32) - ref))) < 5e-2

    # Ragged token count: padded internally, no divisibility assert.
    x_rag = x.reshape(-1, dim)[:13]
    out_rag = jax.block_until_ready(llama3_feedforward(x_rag, w1, w3, w2))
    assert out_rag.shape == (13, dim)
    assert jnp.allclose(out_rag, ref.reshape(-1, dim)[:13], atol=1e-4, rtol=1e-3)

    print("KERNEL_OK")
</pallas_src>

<mosaic_0001>
module attributes {stable_mosaic.version = 11 : i64} {
  func.func @_ffn_kernel(%arg0: i32, %arg1: i32, %arg2: memref<16x128xf32, #tpu.memory_space<vmem>>, %arg3: memref<128x768xf32, #tpu.memory_space<vmem>>, %arg4: memref<384x128xf32, #tpu.memory_space<vmem>>, %arg5: memref<16x128xf32, #tpu.memory_space<vmem>>, %arg6: memref<16x128xf32, #tpu.memory_space<vmem>>) attributes {dimension_semantics = [#tpu.dimension_semantics<parallel>, #tpu.dimension_semantics<arbitrary>], iteration_bounds = array<i64: 1, 1>, scalar_prefetch = 0 : i64, scratch_operands = 1 : i64, tpu.core_type = #tpu.core_type<tc>, window_params = [{transform_indices = @transform_0, window_bounds = array<i64: 16, 128>}, {transform_indices = @transform_1, window_bounds = array<i64: 128, 768>}, {transform_indices = @transform_2, window_bounds = array<i64: 384, 128>}, {transform_indices = @transform_3, window_bounds = array<i64: 16, 128>}]} {
    %c0_i32 = arith.constant 0 : i32
    %0 = arith.cmpi eq, %arg1, %c0_i32 : i32
    %1 = arith.extui %0 : i1 to i32
    %c0_i32_0 = arith.constant 0 : i32
    %2 = arith.cmpi ne, %1, %c0_i32_0 : i32
    scf.if %2 {
      %cst_14 = arith.constant 0.000000e+00 : f32
      %23 = vector.broadcast %cst_14 : f32 to vector<16x128xf32>
      %c0_15 = arith.constant 0 : index
      %c0_16 = arith.constant 0 : index
      %24 = vector.load %arg6[%c0_15, %c0_16] : memref<16x128xf32, #tpu.memory_space<vmem>>, vector<16x128xf32>
      tpu.vector_store %arg6[%c0_15, %c0_16], %23 {strides = array<i32>} : memref<16x128xf32, #tpu.memory_space<vmem>>, vector<16x128xf32>,
    } else {
    }
    %c0 = arith.constant 0 : index
    %c0_1 = arith.constant 0 : index
    %3 = vector.load %arg2[%c0, %c0_1] : memref<16x128xf32, #tpu.memory_space<vmem>>, vector<16x128xf32>
    %c0_2 = arith.constant 0 : index
    %c0_3 = arith.constant 0 : index
    %4 = vector.load %arg3[%c0_2, %c0_3] : memref<128x768xf32, #tpu.memory_space<vmem>>, vector<128x768xf32>
    %cst = arith.constant dense<0.000000e+00> : vector<16x768xf32>
    %5 = tpu.matmul %3, %4, %cst {dimension_numbers = #tpu.dot_dimension_numbers<[1], [0], [0], [1], [0, 0, 1, 1], [], []>} : vector<16x128xf32>, vector<128x768xf32>, vector<16x768xf32> -> vector<16x768xf32>
    %6 = vector.extract_strided_slice %5 {offsets = [0, 0], sizes = [16, 384], strides = [1, 1]} : vector<16x768xf32> to vector<16x384xf32>
    %7 = vector.extract_strided_slice %5 {offsets = [0, 384], sizes = [16, 384], strides = [1, 1]} : vector<16x768xf32> to vector<16x384xf32>
    %8 = arith.negf %6 : vector<16x384xf32>
    %9 = math.exp %8 : vector<16x384xf32>
    %cst_4 = arith.constant 1.000000e+00 : f32
    %10 = vector.broadcast %cst_4 : f32 to vector<16x384xf32>
    %11 = arith.addf %10, %9 : vector<16x384xf32>
    %12 = arith.divf %10, %11 : vector<16x384xf32>
    %13 = arith.mulf %6, %12 : vector<16x384xf32>
    %14 = arith.mulf %13, %7 : vector<16x384xf32>
    %c0_5 = arith.constant 0 : index
    %c0_6 = arith.constant 0 : index
    %15 = vector.load %arg6[%c0_5, %c0_6] : memref<16x128xf32, #tpu.memory_space<vmem>>, vector<16x128xf32>
    %c0_7 = arith.constant 0 : index
    %c0_8 = arith.constant 0 : index
    %16 = vector.load %arg4[%c0_7, %c0_8] : memref<384x128xf32, #tpu.memory_space<vmem>>, vector<384x128xf32>
    %cst_9 = arith.constant dense<0.000000e+00> : vector<16x128xf32>
    %17 = tpu.matmul %14, %16, %cst_9 {dimension_numbers = #tpu.dot_dimension_numbers<[1], [0], [0], [1], [0, 0, 1, 1], [], []>} : vector<16x384xf32>, vector<384x128xf32>, vector<16x128xf32> -> vector<16x128xf32>
    %18 = arith.addf %15, %17 : vector<16x128xf32>
    %c0_10 = arith.constant 0 : index
    %c0_11 = arith.constant 0 : index
    %19 = vector.load %arg6[%c0_10, %c0_11] : memref<16x128xf32, #tpu.memory_space<vmem>>, vector<16x128xf32>
    tpu.vector_store %arg6[%c0_10, %c0_11], %18 {strides = array<i32>} : memref<16x128xf32, #tpu.memory_space<vmem>>, vector<16x128xf32>,
    %c0_i32_12 = arith.constant 0 : i32
    %20 = arith.cmpi eq, %arg1, %c0_i32_12 : i32
    %21 = arith.extui %20 : i1 to i32
    %c0_i32_13 = arith.constant 0 : i32
    %22 = arith.cmpi ne, %21, %c0_i32_13 : i32
    scf.if %22 {
      %c0_14 = arith.constant 0 : index
      %c0_15 = arith.constant 0 : index
      %23 = vector.load %arg6[%c0_14, %c0_15] : memref<16x128xf32, #tpu.memory_space<vmem>>, vector<16x128xf32>
      %c0_16 = arith.constant 0 : index
      %c0_17 = arith.constant 0 : index
      %24 = vector.load %arg5[%c0_16, %c0_17] : memref<16x128xf32, #tpu.memory_space<vmem>>, vector<16x128xf32>
      tpu.vector_store %arg5[%c0_16, %c0_17], %23 {strides = array<i32>} : memref<16x128xf32, #tpu.memory_space<vmem>>, vector<16x128xf32>,
    } else {
    }
    return
  }
  func.func @transform_0(%arg0: i32, %arg1: i32) -> (i32, i32) {
    %c0_i32 = arith.constant 0 : i32
    %c0_i32_0 = arith.constant 0 : i32
    return %arg0, %c0_i32 : i32, i32
  }
  func.func @transform_1(%arg0: i32, %arg1: i32) -> (i32, i32) {
    %c0_i32 = arith.constant 0 : i32
    %c0_i32_0 = arith.constant 0 : i32
    return %c0_i32, %arg1 : i32, i32
  }
  func.func @transform_2(%arg0: i32, %arg1: i32) -> (i32, i32) {
    %c0_i32 = arith.constant 0 : i32
    %c0_i32_0 = arith.constant 0 : i32
    return %arg1, %c0_i32 : i32, i32
  }
  func.func @transform_3(%arg0: i32, %arg1: i32) -> (i32, i32) {
    %c0_i32 = arith.constant 0 : i32
    %c0_i32_0 = arith.constant 0 : i32
    return %arg0, %c0_i32 : i32, i32
  }
}

</mosaic_0001>

<llo_original>
// kernel: tpu_custom_call.1
$region0: #{tpu_custom_call.1}
  #allocation0 [shape = 'u32[]', space=smem, size = 0x4, offset = 0x4, fixed_abs, tag = 'smem constant byte address 0x4 - core index']
  #allocation1 [shape = 'u32[144,128]{1,0:T(1,128)}', space=vmem, size = 0x12000, scoped, tag = 'internal scratch']
  #allocation2 [shape = 'f32[16,128]{1,0:T(8,128)}', space=vmem, size = 0x2000, scoped, tag = 'scratch operand']
  %s0 = inlined_call_operand.hbm [shape: f32[16,128], index: 0, kind: input, shape index: {}]
  %s1 = inlined_call_operand.hbm [shape: f32[128,768], index: 1, kind: input, shape index: {}]
  %s2 = inlined_call_operand.hbm [shape: f32[384,128], index: 2, kind: input, shape index: {}]
  %s3 = inlined_call_operand.hbm [shape: f32[16,128], index: 3, kind: output, shape index: {}]
  %s4 = sld [smem:[#allocation0]]
  $region42: #{tpu_custom_call.1} parent=0
    _
  %s6 = ssub.s32 1, %s4
  %s7 = scalar_select 0, %s6, %s4
  $region1: #{tpu_custom_call.1} parent=0
    #allocation3 [shape = 'u8[8192]{0}', space=vmem, size = 0x2000, scoped, tag = 'input window, operand 0, single buffered']
    #allocation4 [shape = 's32[1]{0}', space=sflag, size = 0x4, scoped, tag = 'scoped memory for tpu_custom_call.1']
    #allocation5 [shape = 's32[1]{0}', space=sflag, size = 0x4, scoped, tag = 'scoped memory for tpu_custom_call.1']
    #allocation6 [shape = 'u8[393216]{0}', space=vmem, size = 0x60000, scoped, tag = 'input window, operand 1, single buffered']
    #allocation7 [shape = 's32[1]{0}', space=sflag, size = 0x4, scoped, tag = 'scoped memory for tpu_custom_call.1']
    #allocation8 [shape = 'u8[196608]{0}', space=vmem, size = 0x30000, scoped, tag = 'input window, operand 2, single buffered']
    #allocation9 [shape = 'u8[8192]{0}', space=vmem, size = 0x2000, scoped, tag = 'output window, operand 0, single buffered']
    %8 = vsyncpa [#allocation4], 0
    %9 = vsyncpa [#allocation7], 0
    %10 = vsyncpa [#allocation5], 0
    // Predicated region
    $region2: #{tpu_custom_call.1} parent=1 // pred_check
      _
    $region3: #{tpu_custom_call.1} parent=1 // pred_check_branch
      %12 = sbr.rel (0) target = $region5
    $region4: #{tpu_custom_call.1} parent=1 // pred_region
      %s14 = ssub.s32 256, 256
      %15 = vsyncadd [#allocation4], %s14
      %s16 = sshll.u32 [#allocation3], 4
      %s17 = int_to_ptr.vmem [resolvable:$true] %s16
      %22 = dma.hbm_to_vmem [thread:$0]  %s0, 256, %s17, [#allocation4], 128, 128, 8
    $region5: #{tpu_custom_call.1} parent=1 // pred_fallthru
      _
    // Predicated region
    $region6: #{tpu_custom_call.1} parent=1 // pred_check
      _
    $region7: #{tpu_custom_call.1} parent=1 // pred_check_branch
      %24 = sbr.rel (0) target = $region9
    $region8: #{tpu_custom_call.1} parent=1 // pred_region
      %s26 = ssub.s32 12288, 12288
      %27 = vsyncadd [#allocation7], %s26
      %s28 = sshll.u32 [#allocation6], 4
      %s29 = int_to_ptr.vmem [resolvable:$true] %s28
      %34 = dma.hbm_to_vmem [thread:$0]  %s1, 12288, %s29, [#allocation7], 768, 768, 48
    $region9: #{tpu_custom_call.1} parent=1 // pred_fallthru
      _
    // Predicated region
    $region10: #{tpu_custom_call.1} parent=1 // pred_check
      _
    $region11: #{tpu_custom_call.1} parent=1 // pred_check_branch
      %36 = sbr.rel (0) target = $region13
    $region12: #{tpu_custom_call.1} parent=1 // pred_region
      %s38 = ssub.s32 6144, 6144
      %39 = vsyncadd [#allocation7], %s38
      %s40 = sshll.u32 [#allocation8], 4
      %s41 = int_to_ptr.vmem [resolvable:$true] %s40
      %46 = dma.hbm_to_vmem [thread:$0]  %s2, 6144, %s41, [#allocation7], 128, 128, 8
    $region13: #{tpu_custom_call.1} parent=1 // pred_fallthru
      _
    // Predicated region
    $region14: #{tpu_custom_call.1} parent=1 // pred_check
      _
    $region15: #{tpu_custom_call.1} parent=1 // pred_check_branch
      %48 = sbr.rel (0) target = $region17
    $region16: #{tpu_custom_call.1} parent=1 // pred_region
      %49 = dma.done [#allocation4], 256
    $region17: #{tpu_custom_call.1} parent=1 // pred_fallthru
      _
    // Predicated region
    $region18: #{tpu_custom_call.1} parent=1 // pred_check
      _
    $region19: #{tpu_custom_call.1} parent=1 // pred_check_branch
      %51 = sbr.rel (0) target = $region21
    $region20: #{tpu_custom_call.1} parent=1 // pred_region
      %52 = dma.done [#allocation7], 12288
    $region21: #{tpu_custom_call.1} parent=1 // pred_fallthru
      _
    // Predicated region
    $region22: #{tpu_custom_call.1} parent=1 // pred_check
      _
    $region23: #{tpu_custom_call.1} parent=1 // pred_check_branch
      %54 = sbr.rel (0) target = $region25
    $region24: #{tpu_custom_call.1} parent=1 // pred_region
      %55 = dma.done [#allocation7], 6144
    $region25: #{tpu_custom_call.1} parent=1 // pred_fallthru
      _
    %p56 = scmp.eq.s32.totalorder 0, 0
    // Predicated region
    $region26: #{tpu_custom_call.1} parent=1 // pred_check
      %p57 = pneg %p56
    $region27: #{tpu_custom_call.1} parent=1 // pred_check_branch
      %59 = sbr.rel (%p57) target = $region29
    $region28: #{tpu_custom_call.1} parent=1 // pred_region
      %60 = vst [vmem:[#allocation2] sm:$0xff] 0.0
      %61 = vst [vmem:[#allocation2 + $0x8] sm:$0xff] 0.0
    $region29: #{tpu_custom_call.1} parent=1 // pred_fallthru
      _
    %v62 = vld [vmem:[#allocation3] sm:$0xff]
    %v63 = vld [vmem:[#allocation3 + $0x8] sm:$0xff]
    %v64 = vld [vmem:[#allocation6] sm:$0xff]
    %v65 = vld [vmem:[#allocation6 + $0x8] sm:$0xff]
    %v66 = vld [vmem:[#allocation6 + $0x10] sm:$0xff]
    %v67 = vld [vmem:[#allocation6 + $0x18] sm:$0xff]
    %v68 = vld [vmem:[#allocation6 + $0x20] sm:$0xff]
    %v69 = vld [vmem:[#allocation6 + $0x28] sm:$0xff]
    %v70 = vld [vmem:[#allocation6 + $0x30] sm:$0xff]
    %v71 = vld [vmem:[#allocation6 + $0x38] sm:$0xff]
    %v72 = vld [vmem:[#allocation6 + $0x40] sm:$0xff]
    %v73 = vld [vmem:[#allocation6 + $0x48] sm:$0xff]
    %v74 = vld [vmem:[#allocation6 + $0x50] sm:$0xff]
    %v75 = vld [vmem:[#allocation6 + $0x58] sm:$0xff]
    %v76 = vld [vmem:[#allocation6 + $0x60] sm:$0xff]
    %v77 = vld [vmem:[#allocation6 + $0x68] sm:$0xff]
    %v78 = vld [vmem:[#allocation6 + $0x70] sm:$0xff]
    %v79 = vld [vmem:[#allocation6 + $0x78] sm:$0xff]
    %v80 = vld [vmem:[#allocation6 + $0x80] sm:$0xff]
    %v81 = vld [vmem:[#allocation6 + $0x88] sm:$0xff]
    %v82 = vld [vmem:[#allocation6 + $0x90] sm:$0xff]
    %v83 = vld [vmem:[#allocation6 + $0x98] sm:$0xff]
    %v84 = vld [vmem:[#allocation6 + $0xa0] sm:$0xff]
    %v85 = vld [vmem:[#allocation6 + $0xa8] sm:$0xff]
    %v86 = vld [vmem:[#allocation6 + $0xb0] sm:$0xff]
    %v87 = vld [vmem:[#allocation6 + $0xb8] sm:$0xff]
    %v88 = vld [vmem:[#allocation6 + $0xc0] sm:$0xff]
    %v89 = vld [vmem:[#allocation6 + $0xc8] sm:$0xff]
    %v90 = vld [vmem:[#allocation6 + $0xd0] sm:$0xff]
    %v91 = vld [vmem:[#allocation6 + $0xd8] sm:$0xff]
    %v92 = vld [vmem:[#allocation6 + $0xe0] sm:$0xff]
    %v93 = vld [vmem:[#allocation6 + $0xe8] sm:$0xff]
    %v94 = vld [vmem:[#allocation6 + $0xf0] sm:$0xff]
    %v95 = vld [vmem:[#allocation6 + $0xf8] sm:$0xff]
    %v96 = vld [vmem:[#allocation6 + $0x100] sm:$0xff]
    %v97 = vld [vmem:[#allocation6 + $0x108] sm:$0xff]
    %v98 = vld [vmem:[#allocation6 + $0x110] sm:$0xff]
    %v99 = vld [vmem:[#allocation6 + $0x118] sm:$0xff]
    %v100 = vld [vmem:[#allocation6 + $0x120] sm:$0xff]
    %v101 = vld [vmem:[#allocation6 + $0x128] sm:$0xff]
    %v102 = vld [vmem:[#allocation6 + $0x130] sm:$0xff]
    %v103 = vld [vmem:[#allocation6 + $0x138] sm:$0xff]
    %v104 = vld [vmem:[#allocation6 + $0x140] sm:$0xff]
    %v105 = vld [vmem:[#allocation6 + $0x148] sm:$0xff]
    %v106 = vld [vmem:[#allocation6 + $0x150] sm:$0xff]
    %v107 = vld [vmem:[#allocation6 + $0x158] sm:$0xff]
    %v108 = vld [vmem:[#allocation6 + $0x160] sm:$0xff]
    %v109 = vld [vmem:[#allocation6 + $0x168] sm:$0xff]
    %v110 = vld [vmem:[#allocation6 + $0x170] sm:$0xff]
    %v111 = vld [vmem:[#allocation6 + $0x178] sm:$0xff]
    %v112 = vld [vmem:[#allocation6 + $0x180] sm:$0xff]
    %v113 = vld [vmem:[#allocation6 + $0x188] sm:$0xff]
    %v114 = vld [vmem:[#allocation6 + $0x190] sm:$0xff]
    %v115 = vld [vmem:[#allocation6 + $0x198] sm:$0xff]
    %v116 = vld [vmem:[#allocation6 + $0x1a0] sm:$0xff]
    %v117 = vld [vmem:[#allocation6 + $0x1a8] sm:$0xff]
    %v118 = vld [vmem:[#allocation6 + $0x1b0] sm:$0xff]
    %v119 = vld [vmem:[#allocation6 + $0x1b8] sm:$0xff]
    %v120 = vld [vmem:[#allocation6 + $0x1c0] sm:$0xff]
    %v121 = vld [vmem:[#allocation6 + $0x1c8] sm:$0xff]
    %v122 = vld [vmem:[#allocation6 + $0x1d0] sm:$0xff]
    %v123 = vld [vmem:[#allocation6 + $0x1d8] sm:$0xff]
    %v124 = vld [vmem:[#allocation6 + $0x1e0] sm:$0xff]
    %v125 = vld [vmem:[#allocation6 + $0x1e8] sm:$0xff]
    %v126 = vld [vmem:[#allocation6 + $0x1f0] sm:$0xff]
    %v127 = vld [vmem:[#allocation6 + $0x1f8] sm:$0xff]
    %v128 = vld [vmem:[#allocation6 + $0x200] sm:$0xff]
    %v129 = vld [vmem:[#allocation6 + $0x208] sm:$0xff]
    %v130 = vld [vmem:[#allocation6 + $0x210] sm:$0xff]
    %v131 = vld [vmem:[#allocation6 + $0x218] sm:$0xff]
    %v132 = vld [vmem:[#allocation6 + $0x220] sm:$0xff]
    %v133 = vld [vmem:[#allocation6 + $0x228] sm:$0xff]
    %v134 = vld [vmem:[#allocation6 + $0x230] sm:$0xff]
    %v135 = vld [vmem:[#allocation6 + $0x238] sm:$0xff]
    %v136 = vld [vmem:[#allocation6 + $0x240] sm:$0xff]
    %v137 = vld [vmem:[#allocation6 + $0x248] sm:$0xff]
    %v138 = vld [vmem:[#allocation6 + $0x250] sm:$0xff]
    %v139 = vld [vmem:[#allocation6 + $0x258] sm:$0xff]
    %v140 = vld [vmem:[#allocation6 + $0x260] sm:$0xff]
    %v141 = vld [vmem:[#allocation6 + $0x268] sm:$0xff]
    %v142 = vld [vmem:[#allocation6 + $0x270] sm:$0xff]
    %v143 = vld [vmem:[#allocation6 + $0x278] sm:$0xff]
    %v144 = vld [vmem:[#allocation6 + $0x280] sm:$0xff]
    %v145 = vld [vmem:[#allocation6 + $0x288] sm:$0xff]
    %v146 = vld [vmem:[#allocation6 + $0x290] sm:$0xff]
    %v147 = vld [vmem:[#allocation6 + $0x298] sm:$0xff]
    %v148 = vld [vmem:[#allocation6 + $0x2a0] sm:$0xff]
    %v149 = vld [vmem:[#allocation6 + $0x2a8] sm:$0xff]
    %v150 = vld [vmem:[#allocation6 + $0x2b0] sm:$0xff]
    %v151 = vld [vmem:[#allocation6 + $0x2b8] sm:$0xff]
    %v152 = vld [vmem:[#allocation6 + $0x2c0] sm:$0xff]
    %v153 = vld [vmem:[#allocation6 + $0x2c8] sm:$0xff]
    %v154 = vld [vmem:[#allocation6 + $0x2d0] sm:$0xff]
    %v155 = vld [vmem:[#allocation6 + $0x2d8] sm:$0xff]
    %v156 = vld [vmem:[#allocation6 + $0x2e0] sm:$0xff]
    %v157 = vld [vmem:[#allocation6 + $0x2e8] sm:$0xff]
    %v158 = vld [vmem:[#allocation6 + $0x2f0] sm:$0xff]
    %v159 = vld [vmem:[#allocation6 + $0x2f8] sm:$0xff]
    %160 = vmatprep.subr.mxu0 %v65
    %161 = vmatpush1.msra.mxu0 %v64
    %162 = vmatprep.subr.mxu0 %v71
    %163 = vmatpush1.msra.mxu0 %v70
    %164 = vmatprep.subr.mxu0 %v77
    %165 = vmatpush1.msra.mxu0 %v76
    %166 = vmatprep.subr.mxu0 %v83
    %167 = vmatpush1.msra.mxu0 %v82
    %168 = vmatprep.subr.mxu0 %v89
    %169 = vmatpush1.msra.mxu0 %v88
    %170 = vmatprep.subr.mxu0 %v95
    %171 = vmatpush1.msra.mxu0 %v94
    %172 = vmatprep.subr.mxu0 %v101
    %173 = vmatpush1.msra.mxu0 %v100
    %174 = vmatprep.subr.mxu0 %v107
    %175 = vmatpush1.msra.mxu0 %v106
    %176 = vmatprep.subr.mxu0 %v113
    %177 = vmatpush1.msra.mxu0 %v112
    %178 = vmatprep.subr.mxu0 %v119
    %179 = vmatpush1.msra.mxu0 %v118
    %180 = vmatprep.subr.mxu0 %v125
    %181 = vmatpush1.msra.mxu0 %v124
    %182 = vmatprep.subr.mxu0 %v131
    %183 = vmatpush1.msra.mxu0 %v130
    %184 = vmatprep.subr.mxu0 %v137
    %185 = vmatpush1.msra.mxu0 %v136
    %186 = vmatprep.subr.mxu0 %v143
    %187 = vmatpush1.msra.mxu0 %v142
    %188 = vmatprep.subr.mxu0 %v149
    %189 = vmatpush1.msra.mxu0 %v148
    %190 = vmatprep.subr.mxu0 %v155
    %191 = vmatpush1.msra.mxu0 %v154
    %192 = vmatprep.subr.mxu0 0.0
    %193 = vmatpush1.msra.mxu0 0.0
    %194 = vmatprep.subr.mxu0 0.0
    %195 = vmatpush1.msra.mxu0 0.0
    %196 = vmatprep.subr.mxu0 0.0
    %197 = vmatpush1.msra.mxu0 0.0
    %198 = vmatprep.subr.mxu0 0.0
    %199 = vmatpush1.msra.mxu0 0.0
    %200 = vmatprep.subr.mxu0 0.0
    %201 = vmatpush1.msra.mxu0 0.0
    %202 = vmatprep.subr.mxu0 0.0
    %203 = vmatpush1.msra.mxu0 0.0
    %204 = vmatprep.subr.mxu0 0.0
    %205 = vmatpush1.msra.mxu0 0.0
    %206 = vmatprep.subr.mxu0 0.0
    %207 = vmatpush1.msra.mxu0 0.0
    %208 = vmatprep.subr.mxu0 0.0
    %209 = vmatpush1.msra.mxu0 0.0
    %210 = vmatprep.subr.mxu0 0.0
    %211 = vmatpush1.msra.mxu0 0.0
    %212 = vmatprep.subr.mxu0 0.0
    %213 = vmatpush1.msra.mxu0 0.0
    %214 = vmatprep.subr.mxu0 0.0
    %215 = vmatpush1.msra.mxu0 0.0
    %216 = vmatprep.subr.mxu0 0.0
    %217 = vmatpush1.msra.mxu0 0.0
    %218 = vmatprep.subr.mxu0 0.0
    %219 = vmatpush1.msra.mxu0 0.0
    %220 = vmatprep.subr.mxu0 0.0
    %221 = vmatpush1.msra.mxu0 0.0
    %222 = vmatprep.subr.mxu0 0.0
    %223 = vmatpush1.msra.mxu0 0.0
    %224 = vmatprep.mubr.f32.mxu0 0.0
    %225 = vmatmul.mubr.f32.gmra.mrb[0].mxu0 %v62
    %v226 = vpop.f32.mrb[0].mxu0
    %v227 = vadd.f32 0.0, %v226
    %v228 = vpop.f32.mrb[0].mxu0
    %v229 = vadd.f32 0.0, %v228
    %230 = vmatprep.mubr.f32.mxu0 0.0
    %231 = vmatmul.mubr.f32.gmra.mrb[0].mxu0 %v63
    %v232 = vpop.f32.mrb[0].mxu0
    %v233 = vadd.f32 0.0, %v232
    %v234 = vpop.f32.mrb[0].mxu0
    %v235 = vadd.f32 0.0, %v234
    %236 = vdwg.mxu0
    %237 = vmatprep.subr.mxu0 %v67
    %238 = vmatpush1.msra.mxu0 %v66
    %239 = vmatprep.subr.mxu0 %v73
    %240 = vmatpush1.msra.mxu0 %v72
    %241 = vmatprep.subr.mxu0 %v79
    %242 = vmatpush1.msra.mxu0 %v78
    %243 = vmatprep.subr.mxu0 %v85
    %244 = vmatpush1.msra.mxu0 %v84
    %245 = vmatprep.subr.mxu0 %v91
    %246 = vmatpush1.msra.mxu0 %v90
    %247 = vmatprep.subr.mxu0 %v97
    %248 = vmatpush1.msra.mxu0 %v96
    %249 = vmatprep.subr.mxu0 %v103
    %250 = vmatpush1.msra.mxu0 %v102
    %251 = vmatprep.subr.mxu0 %v109
    %252 = vmatpush1.msra.mxu0 %v108
    %253 = vmatprep.subr.mxu0 %v115
    %254 = vmatpush1.msra.mxu0 %v114
    %255 = vmatprep.subr.mxu0 %v121
    %256 = vmatpush1.msra.mxu0 %v120
    %257 = vmatprep.subr.mxu0 %v127
    %258 = vmatpush1.msra.mxu0 %v126
    %259 = vmatprep.subr.mxu0 %v133
    %260 = vmatpush1.msra.mxu0 %v132
    %261 = vmatprep.subr.mxu0 %v139
    %262 = vmatpush1.msra.mxu0 %v138
    %263 = vmatprep.subr.mxu0 %v145
    %264 = vmatpush1.msra.mxu0 %v144
    %265 = vmatprep.subr.mxu0 %v151
    %266 = vmatpush1.msra.mxu0 %v150
    %267 = vmatprep.subr.mxu0 %v157
    %268 = vmatpush1.msra.mxu0 %v156
    %269 = vmatprep.subr.mxu0 0.0
    %270 = vmatpush1.msra.mxu0 0.0
    %271 = vmatprep.subr.mxu0 0.0
    %272 = vmatpush1.msra.mxu0 0.0
    %273 = vmatprep.subr.mxu0 0.0
    %274 = vmatpush1.msra.mxu0 0.0
    %275 = vmatprep.subr.mxu0 0.0
    %276 = vmatpush1.msra.mxu0 0.0
    %277 = vmatprep.subr.mxu0 0.0
    %278 = vmatpush1.msra.mxu0 0.0
    %279 = vmatprep.subr.mxu0 0.0
    %280 = vmatpush1.msra.mxu0 0.0
    %281 = vmatprep.subr.mxu0 0.0
    %282 = vmatpush1.msra.mxu0 0.0
    %283 = vmatprep.subr.mxu0 0.0
    %284 = vmatpush1.msra.mxu0 0.0
    %285 = vmatprep.subr.mxu0 0.0
    %286 = vmatpush1.msra.mxu0 0.0
    %287 = vmatprep.subr.mxu0 0.0
    %288 = vmatpush1.msra.mxu0 0.0
    %289 = vmatprep.subr.mxu0 0.0
    %290 = vmatpush1.msra.mxu0 0.0
    %291 = vmatprep.subr.mxu0 0.0
    %292 = vmatpush1.msra.mxu0 0.0
    %293 = vmatprep.subr.mxu0 0.0
    %294 = vmatpush1.msra.mxu0 0.0
    %295 = vmatprep.subr.mxu0 0.0
    %296 = vmatpush1.msra.mxu0 0.0
    %297 = vmatprep.subr.mxu0 0.0
    %298 = vmatpush1.msra.mxu0 0.0
    %299 = vmatprep.subr.mxu0 0.0
    %300 = vmatpush1.msra.mxu0 0.0
    %301 = vmatprep.mubr.f32.mxu0 0.0
    %302 = vmatmul.mubr.f32.gmra.mrb[0].mxu0 %v62
    %v303 = vpop.f32.mrb[0].mxu0
    %v304 = vadd.f32 0.0, %v303
    %v305 = vpop.f32.mrb[0].mxu0
    %v306 = vadd.f32 0.0, %v305
    %307 = vmatprep.mubr.f32.mxu0 0.0
    %308 = vmatmul.mubr.f32.gmra.mrb[0].mxu0 %v63
    %v309 = vpop.f32.mrb[0].mxu0
    %v310 = vadd.f32 0.0, %v309
    %v311 = vpop.f32.mrb[0].mxu0
    %v312 = vadd.f32 0.0, %v311
    %313 = vdwg.mxu0
    %314 = vmatprep.subr.mxu0 %v69
    %315 = vmatpush1.msra.mxu0 %v68
    %316 = vmatprep.subr.mxu0 %v75
    %317 = vmatpush1.msra.mxu0 %v74
    %318 = vmatprep.subr.mxu0 %v81
    %319 = vmatpush1.msra.mxu0 %v80
    %320 = vmatprep.subr.mxu0 %v87
    %321 = vmatpush1.msra.mxu0 %v86
    %322 = vmatprep.subr.mxu0 %v93
    %323 = vmatpush1.msra.mxu0 %v92
    %324 = vmatprep.subr.mxu0 %v99
    %325 = vmatpush1.msra.mxu0 %v98
    %326 = vmatprep.subr.mxu0 %v105
    %327 = vmatpush1.msra.mxu0 %v104
    %328 = vmatprep.subr.mxu0 %v111
    %329 = vmatpush1.msra.mxu0 %v110
    %330 = vmatprep.subr.mxu0 %v117
    %331 = vmatpush1.msra.mxu0 %v116
    %332 = vmatprep.subr.mxu0 %v123
    %333 = vmatpush1.msra.mxu0 %v122
    %334 = vmatprep.subr.mxu0 %v129
    %335 = vmatpush1.msra.mxu0 %v128
    %336 = vmatprep.subr.mxu0 %v135
    %337 = vmatpush1.msra.mxu0 %v134
    %338 = vmatprep.subr.mxu0 %v141
    %339 = vmatpush1.msra.mxu0 %v140
    %340 = vmatprep.subr.mxu0 %v147
    %341 = vmatpush1.msra.mxu0 %v146
    %342 = vmatprep.subr.mxu0 %v153
    %343 = vmatpush1.msra.mxu0 %v152
    %344 = vmatprep.subr.mxu0 %v159
    %345 = vmatpush1.msra.mxu0 %v158
    %346 = vmatprep.subr.mxu0 0.0
    %347 = vmatpush1.msra.mxu0 0.0
    %348 = vmatprep.subr.mxu0 0.0
    %349 = vmatpush1.msra.mxu0 0.0
    %350 = vmatprep.subr.mxu0 0.0
    %351 = vmatpush1.msra.mxu0 0.0
    %352 = vmatprep.subr.mxu0 0.0
    %353 = vmatpush1.msra.mxu0 0.0
    %354 = vmatprep.subr.mxu0 0.0
    %355 = vmatpush1.msra.mxu0 0.0
    %356 = vmatprep.subr.mxu0 0.0
    %357 = vmatpush1.msra.mxu0 0.0
    %358 = vmatprep.subr.mxu0 0.0
    %359 = vmatpush1.msra.mxu0 0.0
    %360 = vmatprep.subr.mxu0 0.0
    %361 = vmatpush1.msra.mxu0 0.0
    %362 = vmatprep.subr.mxu0 0.0
    %363 = vmatpush1.msra.mxu0 0.0
    %364 = vmatprep.subr.mxu0 0.0
    %365 = vmatpush1.msra.mxu0 0.0
    %366 = vmatprep.subr.mxu0 0.0
    %367 = vmatpush1.msra.mxu0 0.0
    %368 = vmatprep.subr.mxu0 0.0
    %369 = vmatpush1.msra.mxu0 0.0
    %370 = vmatprep.subr.mxu0 0.0
    %371 = vmatpush1.msra.mxu0 0.0
    %372 = vmatprep.subr.mxu0 0.0
    %373 = vmatpush1.msra.mxu0 0.0
    %374 = vmatprep.subr.mxu0 0.0
    %375 = vmatpush1.msra.mxu0 0.0
    %376 = vmatprep.subr.mxu0 0.0
    %377 = vmatpush1.msra.mxu0 0.0
    %378 = vmatprep.mubr.f32.mxu0 0.0
    %379 = vmatmul.mubr.f32.gmra.mrb[0].mxu0 %v62
    %v380 = vpop.f32.mrb[0].mxu0
    %v381 = vadd.f32 0.0, %v380
    %v382 = vpop.f32.mrb[0].mxu0
    %v383 = vadd.f32 0.0, %v382
    %384 = vmatprep.mubr.f32.mxu0 0.0
    %385 = vmatmul.mubr.f32.gmra.mrb[0].mxu0 %v63
    %v386 = vpop.f32.mrb[0].mxu0
    %v387 = vadd.f32 0.0, %v386
    %v388 = vpop.f32.mrb[0].mxu0
    %v389 = vadd.f32 0.0, %v388
    %390 = vdwg.mxu0
    %v391 = vxor.u32 %v227, 2147483648
    %v392 = vxor.u32 %v229, 2147483648
    %v393 = vxor.u32 %v304, 2147483648
    %v394 = vxor.u32 %v233, 2147483648
    %v395 = vxor.u32 %v235, 2147483648
    %v396 = vxor.u32 %v310, 2147483648
    %v397 = vmul.f32 %v391, 1.442695
    %v398 = vpow.pop %v397
    %v399 = vmul.f32 %v392, 1.442695
    %v400 = vpow.pop %v399
    %v401 = vmul.f32 %v393, 1.442695
    %v402 = vpow.pop %v401
    %v403 = vmul.f32 %v394, 1.442695
    %v404 = vpow.pop %v403
    %v405 = vmul.f32 %v395, 1.442695
    %v406 = vpow.pop %v405
    %v407 = vmul.f32 %v396, 1.442695
    %v408 = vpow.pop %v407
    %v409 = vadd.f32 %v398, 1.0
    %v410 = vadd.f32 %v400, 1.0
    %v411 = vadd.f32 %v402, 1.0
    %v412 = vadd.f32 %v404, 1.0
    %v413 = vadd.f32 %v406, 1.0
    %v414 = vadd.f32 %v408, 1.0
    %v415 = vrcp.pop %v409
    %v416 = vmul.f32 1.0, %v415
    %v417 = vrcp.pop %v410
    %v418 = vmul.f32 1.0, %v417
    %v419 = vrcp.pop %v411
    %v420 = vmul.f32 1.0, %v419
    %v421 = vrcp.pop %v412
    %v422 = vmul.f32 1.0, %v421
    %v423 = vrcp.pop %v413
    %v424 = vmul.f32 1.0, %v423
    %v425 = vrcp.pop %v414
    %v426 = vmul.f32 1.0, %v425
    %v427 = vmul.f32 %v227, %v416
    %v428 = vmul.f32 %v229, %v418
    %v429 = vmul.f32 %v304, %v420
    %v430 = vmul.f32 %v233, %v422
    %v431 = vmul.f32 %v235, %v424
    %v432 = vmul.f32 %v310, %v426
    %v433 = vmul.f32 %v427, %v306
    %v434 = vmul.f32 %v428, %v381
    %v435 = vmul.f32 %v429, %v383
    %v436 = vmul.f32 %v430, %v312
    %v437 = vmul.f32 %v431, %v387
    %v438 = vmul.f32 %v432, %v389
    %v439 = vld [vmem:[#allocation2] sm:$0xff]
    %v440 = vld [vmem:[#allocation2 + $0x8] sm:$0xff]
    %v441 = vld [vmem:[#allocation8] sm:$0xff]
    %v442 = vld [vmem:[#allocation8 + $0x8] sm:$0xff]
    %v443 = vld [vmem:[#allocation8 + $0x10] sm:$0xff]
    %v444 = vld [vmem:[#allocation8 + $0x18] sm:$0xff]
    %v445 = vld [vmem:[#allocation8 + $0x20] sm:$0xff]
    %v446 = vld [vmem:[#allocation8 + $0x28] sm:$0xff]
    %v447 = vld [vmem:[#allocation8 + $0x30] sm:$0xff]
    %v448 = vld [vmem:[#allocation8 + $0x38] sm:$0xff]
    %v449 = vld [vmem:[#allocation8 + $0x40] sm:$0xff]
    %v450 = vld [vmem:[#allocation8 + $0x48] sm:$0xff]
    %v451 = vld [vmem:[#allocation8 + $0x50] sm:$0xff]
    %v452 = vld [vmem:[#allocation8 + $0x58] sm:$0xff]
    %v453 = vld [vmem:[#allocation8 + $0x60] sm:$0xff]
    %v454 = vld [vmem:[#allocation8 + $0x68] sm:$0xff]
    %v455 = vld [vmem:[#allocation8 + $0x70] sm:$0xff]
    %v456 = vld [vmem:[#allocation8 + $0x78] sm:$0xff]
    %v457 = vld [vmem:[#allocation8 + $0x80] sm:$0xff]
    %v458 = vld [vmem:[#allocation8 + $0x88] sm:$0xff]
    %v459 = vld [vmem:[#allocation8 + $0x90] sm:$0xff]
    %v460 = vld [vmem:[#allocation8 + $0x98] sm:$0xff]
    %v461 = vld [vmem:[#allocation8 + $0xa0] sm:$0xff]
    %v462 = vld [vmem:[#allocation8 + $0xa8] sm:$0xff]
    %v463 = vld [vmem:[#allocation8 + $0xb0] sm:$0xff]
    %v464 = vld [vmem:[#allocation8 + $0xb8] sm:$0xff]
    %v465 = vld [vmem:[#allocation8 + $0xc0] sm:$0xff]
    %v466 = vld [vmem:[#allocation8 + $0xc8] sm:$0xff]
    %v467 = vld [vmem:[#allocation8 + $0xd0] sm:$0xff]
    %v468 = vld [vmem:[#allocation8 + $0xd8] sm:$0xff]
    %v469 = vld [vmem:[#allocation8 + $0xe0] sm:$0xff]
    %v470 = vld [vmem:[#allocation8 + $0xe8] sm:$0xff]
    %v471 = vld [vmem:[#allocation8 + $0xf0] sm:$0xff]
    %v472 = vld [vmem:[#allocation8 + $0xf8] sm:$0xff]
    %v473 = vld [vmem:[#allocation8 + $0x100] sm:$0xff]
    %v474 = vld [vmem:[#allocation8 + $0x108] sm:$0xff]
    %v475 = vld [vmem:[#allocation8 + $0x110] sm:$0xff]
    %v476 = vld [vmem:[#allocation8 + $0x118] sm:$0xff]
    %v477 = vld [vmem:[#allocation8 + $0x120] sm:$0xff]
    %v478 = vld [vmem:[#allocation8 + $0x128] sm:$0xff]
    %v479 = vld [vmem:[#allocation8 + $0x130] sm:$0xff]
    %v480 = vld [vmem:[#allocation8 + $0x138] sm:$0xff]
    %v481 = vld [vmem:[#allocation8 + $0x140] sm:$0xff]
    %v482 = vld [vmem:[#allocation8 + $0x148] sm:$0xff]
    %v483 = vld [vmem:[#allocation8 + $0x150] sm:$0xff]
    %v484 = vld [vmem:[#allocation8 + $0x158] sm:$0xff]
    %v485 = vld [vmem:[#allocation8 + $0x160] sm:$0xff]
    %v486 = vld [vmem:[#allocation8 + $0x168] sm:$0xff]
    %v487 = vld [vmem:[#allocation8 + $0x170] sm:$0xff]
    %v488 = vld [vmem:[#allocation8 + $0x178] sm:$0xff]
    %489 = vmatprep.subr.mxu0 0.0
    %490 = vmatpush1.msra.mxu0 %v441
    %491 = vmatprep.subr.mxu0 0.0
    %492 = vmatpush1.msra.mxu0 %v442
    %493 = vmatprep.subr.mxu0 0.0
    %494 = vmatpush1.msra.mxu0 %v443
    %495 = vmatprep.subr.mxu0 0.0
    %496 = vmatpush1.msra.mxu0 %v444
    %497 = vmatprep.subr.mxu0 0.0
    %498 = vmatpush1.msra.mxu0 %v445
    %499 = vmatprep.subr.mxu0 0.0
    %500 = vmatpush1.msra.mxu0 %v446
    %501 = vmatprep.subr.mxu0 0.0
    %502 = vmatpush1.msra.mxu0 %v447
    %503 = vmatprep.subr.mxu0 0.0
    %504 = vmatpush1.msra.mxu0 %v448
    %505 = vmatprep.subr.mxu0 0.0
    %506 = vmatpush1.msra.mxu0 %v449
    %507 = vmatprep.subr.mxu0 0.0
    %508 = vmatpush1.msra.mxu0 %v450
    %509 = vmatprep.subr.mxu0 0.0
    %510 = vmatpush1.msra.mxu0 %v451
    %511 = vmatprep.subr.mxu0 0.0
    %512 = vmatpush1.msra.mxu0 %v452
    %513 = vmatprep.subr.mxu0 0.0
    %514 = vmatpush1.msra.mxu0 %v453
    %515 = vmatprep.subr.mxu0 0.0
    %516 = vmatpush1.msra.mxu0 %v454
    %517 = vmatprep.subr.mxu0 0.0
    %518 = vmatpush1.msra.mxu0 %v455
    %519 = vmatprep.subr.mxu0 0.0
    %520 = vmatpush1.msra.mxu0 %v456
    %521 = vmatprep.subr.mxu0 0.0
    %522 = vmatpush1.msra.mxu0 %v457
    %523 = vmatprep.subr.mxu0 0.0
    %524 = vmatpush1.msra.mxu0 %v458
    %525 = vmatprep.subr.mxu0 0.0
    %526 = vmatpush1.msra.mxu0 %v459
    %527 = vmatprep.subr.mxu0 0.0
    %528 = vmatpush1.msra.mxu0 %v460
    %529 = vmatprep.subr.mxu0 0.0
    %530 = vmatpush1.msra.mxu0 %v461
    %531 = vmatprep.subr.mxu0 0.0
    %532 = vmatpush1.msra.mxu0 %v462
    %533 = vmatprep.subr.mxu0 0.0
    %534 = vmatpush1.msra.mxu0 %v463
    %535 = vmatprep.subr.mxu0 0.0
    %536 = vmatpush1.msra.mxu0 %v464
    %537 = vmatprep.subr.mxu0 0.0
    %538 = vmatpush1.msra.mxu0 %v465
    %539 = vmatprep.subr.mxu0 0.0
    %540 = vmatpush1.msra.mxu0 %v466
    %541 = vmatprep.subr.mxu0 0.0
    %542 = vmatpush1.msra.mxu0 %v467
    %543 = vmatprep.subr.mxu0 0.0
    %544 = vmatpush1.msra.mxu0 %v468
    %545 = vmatprep.subr.mxu0 0.0
    %546 = vmatpush1.msra.mxu0 %v469
    %547 = vmatprep.subr.mxu0 0.0
    %548 = vmatpush1.msra.mxu0 %v470
    %549 = vmatprep.subr.mxu0 0.0
    %550 = vmatpush1.msra.mxu0 %v471
    %551 = vmatprep.subr.mxu0 0.0
    %552 = vmatpush1.msra.mxu0 %v472
    %553 = vmatprep.mubr.f32.mxu0 %v434
    %554 = vmatmul.mubr.f32.gmra.mrb[0].mxu0 %v433
    %v555 = vpop.f32.mrb[0].mxu0
    %v556 = vadd.f32 0.0, %v555
    %v557 = vpop.f32.mrb[0].mxu0
    %558 = vmatprep.mubr.f32.mxu0 %v437
    %559 = vmatmul.mubr.f32.gmra.mrb[0].mxu0 %v436
    %v560 = vpop.f32.mrb[0].mxu0
    %v561 = vadd.f32 0.0, %v560
    %v562 = vpop.f32.mrb[0].mxu0
    %563 = vdwg.mxu0
    %564 = vmatprep.subr.mxu0 0.0
    %565 = vmatpush1.msra.mxu0 %v473
    %566 = vmatprep.subr.mxu0 0.0
    %567 = vmatpush1.msra.mxu0 %v474
    %568 = vmatprep.subr.mxu0 0.0
    %569 = vmatpush1.msra.mxu0 %v475
    %570 = vmatprep.subr.mxu0 0.0
    %571 = vmatpush1.msra.mxu0 %v476
    %572 = vmatprep.subr.mxu0 0.0
    %573 = vmatpush1.msra.mxu0 %v477
    %574 = vmatprep.subr.mxu0 0.0
    %575 = vmatpush1.msra.mxu0 %v478
    %576 = vmatprep.subr.mxu0 0.0
    %577 = vmatpush1.msra.mxu0 %v479
    %578 = vmatprep.subr.mxu0 0.0
    %579 = vmatpush1.msra.mxu0 %v480
    %580 = vmatprep.subr.mxu0 0.0
    %581 = vmatpush1.msra.mxu0 %v481
    %582 = vmatprep.subr.mxu0 0.0
    %583 = vmatpush1.msra.mxu0 %v482
    %584 = vmatprep.subr.mxu0 0.0
    %585 = vmatpush1.msra.mxu0 %v483
    %586 = vmatprep.subr.mxu0 0.0
    %587 = vmatpush1.msra.mxu0 %v484
    %588 = vmatprep.subr.mxu0 0.0
    %589 = vmatpush1.msra.mxu0 %v485
    %590 = vmatprep.subr.mxu0 0.0
    %591 = vmatpush1.msra.mxu0 %v486
    %592 = vmatprep.subr.mxu0 0.0
    %593 = vmatpush1.msra.mxu0 %v487
    %594 = vmatprep.subr.mxu0 0.0
    %595 = vmatpush1.msra.mxu0 %v488
    %596 = vmatprep.subr.mxu0 0.0
    %597 = vmatpush1.msra.mxu0 0.0
    %598 = vmatprep.subr.mxu0 0.0
    %599 = vmatpush1.msra.mxu0 0.0
    %600 = vmatprep.subr.mxu0 0.0
    %601 = vmatpush1.msra.mxu0 0.0
    %602 = vmatprep.subr.mxu0 0.0
    %603 = vmatpush1.msra.mxu0 0.0
    %604 = vmatprep.subr.mxu0 0.0
    %605 = vmatpush1.msra.mxu0 0.0
    %606 = vmatprep.subr.mxu0 0.0
    %607 = vmatpush1.msra.mxu0 0.0
    %608 = vmatprep.subr.mxu0 0.0
    %609 = vmatpush1.msra.mxu0 0.0
    %610 = vmatprep.subr.mxu0 0.0
    %611 = vmatpush1.msra.mxu0 0.0
    %612 = vmatprep.subr.mxu0 0.0
    %613 = vmatpush1.msra.mxu0 0.0
    %614 = vmatprep.subr.mxu0 0.0
    %615 = vmatpush1.msra.mxu0 0.0
    %616 = vmatprep.subr.mxu0 0.0
    %617 = vmatpush1.msra.mxu0 0.0
    %618 = vmatprep.subr.mxu0 0.0
    %619 = vmatpush1.msra.mxu0 0.0
    %620 = vmatprep.subr.mxu0 0.0
    %621 = vmatpush1.msra.mxu0 0.0
    %622 = vmatprep.subr.mxu0 0.0
    %623 = vmatpush1.msra.mxu0 0.0
    %624 = vmatprep.subr.mxu0 0.0
    %625 = vmatpush1.msra.mxu0 0.0
    %626 = vmatprep.subr.mxu0 0.0
    %627 = vmatpush1.msra.mxu0 0.0
    %628 = vmatprep.mubr.f32.mxu0 0.0
    %629 = vmatmul.mubr.f32.gmra.mrb[0].mxu0 %v435
    %v630 = vpop.f32.mrb[0].mxu0
    %v631 = vadd.f32 %v556, %v630
    %v632 = vpop.f32.mrb[0].mxu0
    %633 = vmatprep.mubr.f32.mxu0 0.0
    %634 = vmatmul.mubr.f32.gmra.mrb[0].mxu0 %v438
    %v635 = vpop.f32.mrb[0].mxu0
    %v636 = vadd.f32 %v561, %v635
    %v637 = vpop.f32.mrb[0].mxu0
    %638 = vdwg.mxu0
    %v639 = vadd.f32 %v439, %v631
    %v640 = vadd.f32 %v440, %v636
    %641 = vst [vmem:[#allocation2] sm:$0xff] %v639
    %642 = vst [vmem:[#allocation2 + $0x8] sm:$0xff] %v640
    // Predicated region
    $region30: #{tpu_custom_call.1} parent=1 // pred_check
      %p643 = pneg %p56
    $region31: #{tpu_custom_call.1} parent=1 // pred_check_branch
      %645 = sbr.rel (%p643) target = $region33
    $region32: #{tpu_custom_call.1} parent=1 // pred_region
      %v646 = vld [vmem:[#allocation2] sm:$0xff]
      %v647 = vld [vmem:[#allocation2 + $0x8] sm:$0xff]
      %648 = vst [vmem:[#allocation9] sm:$0xff] %v646
      %649 = vst [vmem:[#allocation9 + $0x8] sm:$0xff] %v647
    $region33: #{tpu_custom_call.1} parent=1 // pred_fallthru
      _
    // Predicated region
    $region34: #{tpu_custom_call.1} parent=1 // pred_check
      _
    $region35: #{tpu_custom_call.1} parent=1 // pred_check_branch
      %651 = sbr.rel (0) target = $region37
    $region36: #{tpu_custom_call.1} parent=1 // pred_region
      %s653 = ssub.s32 256, 256
      %654 = vsyncadd [#allocation5], %s653
      %s655 = sshll.u32 [#allocation9], 4
      %s656 = int_to_ptr.vmem [resolvable:$true] %s655
      %661 = dma.vmem_to_hbm [thread:$0]  %s656, 256, %s3, [#allocation5], 128, 128, 8
    $region37: #{tpu_custom_call.1} parent=1 // pred_fallthru
      _
    // Predicated region
    $region38: #{tpu_custom_call.1} parent=1 // pred_check
      _
    $region39: #{tpu_custom_call.1} parent=1 // pred_check_branch
      %663 = sbr.rel (0) target = $region41
    $region40: #{tpu_custom_call.1} parent=1 // pred_region
      %664 = dma.done [#allocation5], 256
    $region41: #{tpu_custom_call.1} parent=1 // pred_fallthru
      _
    %665 = vsyncpa [#allocation4], 1
    %666 = vsyncpa [#allocation7], 1
    %667 = vsyncpa [#allocation5], 1

</llo_original>
